<compile_context>
chip_gen: v7x
topology: tpu7x:2x2x1
jax: 0.10.0
libtpu: 0.0.40
codegen_flags: <defaults>
</compile_context>

<pallas_src>
import math

import jax
import jax.numpy as jnp
from jax.experimental import pallas as pl
from jax.experimental.pallas import tpu as pltpu

_LANE = 128
_MAX_PACKED_WIDTH = 1024          # cap on lcm-based output packing
_VMEM_TILE_BUDGET = 48 * 1024 * 1024


def _round_up(a, b):
    return ((a + b - 1) // b) * b


def _cdiv(a, b):
    return -(-a // b)


def _make_kernel(unroll_k: bool):
    def kernel(x_ref, b_ref, ph_ref, o_ref):
        # x_ref: [T, Kp], b_ref: [Kp, W], ph_ref: [1, W], o_ref: [T, W]
        if unroll_k:
            # Tiny un-packed contraction: unrolled VPU broadcast-FMAs.
            k_dim = b_ref.shape[0]
            proj = x_ref[:, 0:1] * b_ref[0:1, :]
            for k in range(1, k_dim):
                proj = proj + x_ref[:, k : k + 1] * b_ref[k : k + 1, :]
        else:
            # Packed / larger contraction: MXU (vector-extended slot), keeping
            # the VALU free for sin's range reduction + polynomial.
            proj = jnp.dot(
                x_ref[...], b_ref[...], preferred_element_type=jnp.float32
            )
        # 2*pi is folded into b_ref; +pi/2 on the "cos" lanes turns
        # concat([sin, cos]) into a single full-width sin and one unmasked,
        # lane-dense store.
        o_ref[...] = jnp.sin(proj + ph_ref[...]).astype(o_ref.dtype)

    return kernel


def _prepare_params(B):
    """Fold 2*pi, duplicate for the sin/cos halves, and pack multiple logical
    rows per 128-lane output row (block-diagonal frozen parameter) so every
    output store is a full unmasked 128-lane vst."""
    K, half = B.shape
    embed = 2 * half
    B2 = (2.0 * jnp.pi) * B.astype(jnp.float32)
    B_cat = jnp.concatenate([B2, B2], axis=1)                       # [K, embed]
    phase_row = jnp.concatenate(
        [jnp.zeros((half,), jnp.float32),
         jnp.full((half,), jnp.pi / 2, jnp.float32)])               # [embed]

    if embed % _LANE == 0:
        rows, out_w = 1, embed
        B_big, phase = B_cat, phase_row
    else:
        lcm = embed * _LANE // math.gcd(embed, _LANE)
        if lcm <= _MAX_PACKED_WIDTH:
            # Pack lcm/embed logical rows into lcm/128 physical 128-lane rows.
            rows = lcm // embed
            B_big = jnp.kron(jnp.eye(rows, dtype=jnp.float32), B_cat)  # [K*rows, lcm]
            phase = jnp.tile(phase_row, rows)                          # [lcm]
            out_w = lcm
        else:
            # Fallback: zero-pad the output width to the next multiple of 128
            # (unmasked stores; junk lanes sliced off in the wrapper).
            rows = 1
            out_w = _round_up(embed, _LANE)
            B_big = jnp.pad(B_cat, ((0, 0), (0, out_w - embed)))
            phase = jnp.pad(phase_row, (0, out_w - embed))
    return B_big, phase.reshape(1, out_w), rows, out_w, embed


def fourier_embedding(x, B, *, tile_rows=2048, out_dtype=jnp.float32):
    """x: [..., input_dims]; B: [input_dims, embed_dims//2] (frozen).
    Returns [..., embed_dims] in out_dtype.  Use out_dtype=jnp.bfloat16 on
    write-bandwidth-bound chips (v5e/v6e) when the consumer accepts it."""
    K = B.shape[0]
    B_big, phase, rows, out_w, embed = _prepare_params(B)
    k_big = B_big.shape[0]
    in_w = rows * K
    out_itemsize = jnp.dtype(out_dtype).itemsize

    orig_shape = x.shape
    x2d = x.reshape(-1, K).astype(jnp.float32)
    n = x2d.shape[0]

    # --- balanced, VMEM-bounded tile size ----------------------------------
    tile_rows = _round_up(max(int(tile_rows), 8), 8)
    # Budget the x tile at its lane-padded footprint: a [T, in_w] f32 block
    # occupies full (8,128) VMEM tiles even when in_w < 128.
    bytes_per_slab_row = _round_up(in_w, _LANE) * 4 + out_w * out_itemsize
    max_tile_by_vmem = max(
        8, ((_VMEM_TILE_BUDGET // (2 * bytes_per_slab_row)) // 8) * 8)
    tile_rows = min(tile_rows, max_tile_by_vmem)

    n_slab_raw = max(_cdiv(n, rows), 1)
    # >= ~4 grid steps when enough work exists: shards across v7x's two
    # TensorCores and gives the pipeline something to overlap.
    min_steps = min(4, _cdiv(n_slab_raw, 8))
    num_tiles_target = max(_cdiv(n_slab_raw, tile_rows), min_steps, 1)
    tile_slab = _round_up(_cdiv(n_slab_raw, num_tiles_target), 8)
    tile_slab = min(tile_slab, tile_rows)
    num_tiles = _cdiv(n_slab_raw, tile_slab)
    n_slab = num_tiles * tile_slab
    n_pad = n_slab * rows

    if n_pad != n:
        x2d = jnp.pad(x2d, ((0, n_pad - n), (0, 0)))
    x_packed = x2d.reshape(n_slab, in_w)                 # free row-major reshape

    # MXU whenever the block-diagonal packing is active (rows > 1); the
    # unrolled VPU path only for a genuinely tiny un-packed contraction.
    kernel = _make_kernel(unroll_k=(rows == 1 and K <= 8))

    # Explicit VMEM limit only when the double-buffered tiles outgrow the
    # conservative v5e scoped default; capped below v7x physical VMEM.
    vmem_need = (2 * tile_slab * bytes_per_slab_row
                 + 2 * (k_big * out_w + out_w) * 4)
    vmem_limit = None
    if vmem_need > 12 * 1024 * 1024:
        vmem_limit = min(int(vmem_need * 1.25) + (2 << 20), 64 * 1024 * 1024)

    cost = pl.CostEstimate(
        flops=2 * n_slab * k_big * out_w + n_slab * out_w,
        transcendentals=n_slab * out_w,
        bytes_accessed=(n_slab * in_w * 4 + k_big * out_w * 4 + out_w * 4
                        + n_slab * out_w * out_itemsize),
    )

    out_slab = pl.pallas_call(
        kernel,
        out_shape=jax.ShapeDtypeStruct((n_slab, out_w), out_dtype),
        grid_spec=pltpu.PrefetchScalarGridSpec(
            num_scalar_prefetch=0,
            grid=(num_tiles,),
            in_specs=[
                pl.BlockSpec((tile_slab, in_w), lambda i: (i, 0)),
                pl.BlockSpec((k_big, out_w), lambda i: (0, 0)),   # resident
                pl.BlockSpec((1, out_w), lambda i: (0, 0)),       # resident
            ],
            out_specs=pl.BlockSpec((tile_slab, out_w), lambda i: (i, 0)),
        ),
        compiler_params=pltpu.CompilerParams(
            # TODO(synk): if a v7x bundle/profile shows one TC idle, switch
            # this axis to pltpu.CORE_PARALLEL.
            dimension_semantics=("parallel",),
            vmem_limit_bytes=vmem_limit,
        ),
        cost_estimate=cost,
    )(x_packed, B_big, phase)

    if out_w == rows * embed:
        out = out_slab.reshape(n_pad, embed)[:n]          # free reshape (packed)
    else:
        out = out_slab[:n, :embed]                        # lane-padded fallback
    return out.reshape(*orig_shape[:-1], embed)


if __name__ == "__main__":
    key = jax.random.PRNGKey(0)
    kx, kb = jax.random.split(key)

    # Small shapes consistent with the module: batch=2, 64 points, 4-D input,
    # 32-D Fourier embedding.
    input_dims = 4
    embed_dims = 32
    scale = 1.0
    batch, pts = 2, 64

    x = jax.random.normal(kx, (batch, pts, input_dims), dtype=jnp.float32)
    B = scale * jax.random.normal(kb, (input_dims, embed_dims // 2),
                                  dtype=jnp.float32)

    out = fourier_embedding(x, B)
    out = jax.block_until_ready(out)

    # Reference in plain JAX (exact module semantics).
    x_proj = 2.0 * jnp.pi * (x @ B)
    ref = jnp.concatenate([jnp.sin(x_proj), jnp.cos(x_proj)], axis=-1)

    assert out.shape == (batch, pts, embed_dims)
    # Tolerance covers f32 rounding from folding 2*pi into B and the
    # sin(t + pi/2) == cos(t) identity.
    assert jnp.allclose(out, ref, atol=1e-4, rtol=1e-4), float(
        jnp.max(jnp.abs(out - ref)))

    print("KERNEL_OK")
</pallas_src>

<mosaic_0001>
module attributes {stable_mosaic.version = 11 : i64} {
  func.func @kernel(%arg0: i32, %arg1: memref<8x16xf32, #tpu.memory_space<vmem>>, %arg2: memref<16x128xf32, #tpu.memory_space<vmem>>, %arg3: memref<1x128xf32, #tpu.memory_space<vmem>>, %arg4: memref<8x128xf32, #tpu.memory_space<vmem>>) attributes {dimension_semantics = [#tpu.dimension_semantics<parallel>], iteration_bounds = array<i64: 4>, scalar_prefetch = 0 : i64, scratch_operands = 0 : i64, tpu.core_type = #tpu.core_type<tc>, window_params = [{transform_indices = @transform_0, window_bounds = array<i64: 8, 16>}, {pipeline_mode = #tpu.pipeline_mode<synchronous>, transform_indices = @transform_1, window_bounds = array<i64: 16, 128>}, {pipeline_mode = #tpu.pipeline_mode<synchronous>, transform_indices = @transform_2, window_bounds = array<i64: 1, 128>}, {transform_indices = @transform_3, window_bounds = array<i64: 8, 128>}]} {
    %c0 = arith.constant 0 : index
    %c0_0 = arith.constant 0 : index
    %0 = vector.load %arg1[%c0, %c0_0] : memref<8x16xf32, #tpu.memory_space<vmem>>, vector<8x16xf32>
    %c0_1 = arith.constant 0 : index
    %c0_2 = arith.constant 0 : index
    %1 = vector.load %arg2[%c0_1, %c0_2] : memref<16x128xf32, #tpu.memory_space<vmem>>, vector<16x128xf32>
    %cst = arith.constant dense<0.000000e+00> : vector<8x128xf32>
    %2 = tpu.matmul %0, %1, %cst {dimension_numbers = #tpu.dot_dimension_numbers<[1], [0], [0], [1], [0, 0, 1, 1], [], []>} : vector<8x16xf32>, vector<16x128xf32>, vector<8x128xf32> -> vector<8x128xf32>
    %c0_3 = arith.constant 0 : index
    %c0_4 = arith.constant 0 : index
    %3 = vector.load %arg3[%c0_3, %c0_4] : memref<1x128xf32, #tpu.memory_space<vmem>>, vector<1x128xf32>
    %4 = vector.broadcast %3 : vector<1x128xf32> to vector<8x128xf32>
    %5 = arith.addf %2, %4 : vector<8x128xf32>
    %6 = math.sin %5 : vector<8x128xf32>
    %c0_5 = arith.constant 0 : index
    %c0_6 = arith.constant 0 : index
    %7 = vector.load %arg4[%c0_5, %c0_6] : memref<8x128xf32, #tpu.memory_space<vmem>>, vector<8x128xf32>
    tpu.vector_store %arg4[%c0_5, %c0_6], %6 {strides = array<i32>} : memref<8x128xf32, #tpu.memory_space<vmem>>, vector<8x128xf32>,
    return
  }
  func.func @transform_0(%arg0: i32) -> (i32, i32) {
    %c0_i32 = arith.constant 0 : i32
    %c0_i32_0 = arith.constant 0 : i32
    return %arg0, %c0_i32 : i32, i32
  }
  func.func @transform_1(%arg0: i32) -> (i32, i32) {
    %c0_i32 = arith.constant 0 : i32
    %c0_i32_0 = arith.constant 0 : i32
    %c0_i32_1 = arith.constant 0 : i32
    return %c0_i32, %c0_i32_0 : i32, i32
  }
  func.func @transform_2(%arg0: i32) -> (i32, i32) {
    %c0_i32 = arith.constant 0 : i32
    %c0_i32_0 = arith.constant 0 : i32
    %c0_i32_1 = arith.constant 0 : i32
    return %c0_i32, %c0_i32_0 : i32, i32
  }
  func.func @transform_3(%arg0: i32) -> (i32, i32) {
    %c0_i32 = arith.constant 0 : i32
    %c0_i32_0 = arith.constant 0 : i32
    return %arg0, %c0_i32 : i32, i32
  }
}

</mosaic_0001>

<llo_original>
// kernel: tpu_custom_call.1
$region0: #{tpu_custom_call.1}
  #allocation0 [shape = 'u32[]', space=smem, size = 0x4, offset = 0x4, fixed_abs, tag = 'smem constant byte address 0x4 - core index']
  #allocation1 [shape = 'u32[144,128]{1,0:T(1,128)}', space=vmem, size = 0x12000, scoped, tag = 'internal scratch']
  %s0 = inlined_call_operand.vmem [shape: f32[32,16], index: 0, kind: input, shape index: {}]
  %s1 = inlined_call_operand.vmem [shape: f32[16,128], index: 1, kind: input, shape index: {}]
  %s2 = inlined_call_operand.vmem [shape: f32[1,128], index: 2, kind: input, shape index: {}]
  %s3 = inlined_call_operand.hbm [shape: f32[32,128], index: 3, kind: output, shape index: {}]
  %s4 = sld [smem:[#allocation0]]
  $region45: #{tpu_custom_call.1} parent=0
    _
  %s6 = ssub.s32 1, %s4
  %s7 = scalar_select 0, %s6, %s4
  $region1: #{tpu_custom_call.1} parent=0
    #allocation2 [shape = 'u8[8192]{0}', space=vmem, size = 0x2000, scoped, tag = 'output window, operand 0']
    #allocation3 [shape = 's32[2]{0}', space=sflag, size = 0x8, scoped, tag = 'scoped memory for tpu_custom_call.1']
    %8 = vsyncpa [#allocation3], 0
    %s9 = scalar_lea.sflag [#allocation3], 1
    %10 = vsyncpa %s9, 0
    loop: start=0, step=1, limit=6
    $region2: #{tpu_custom_call.1} parent=1 // loop_pre_header
      _
    $region3: #{tpu_custom_call.1} parent=1 // loop_header
      %s12 = sphi 0, %s16
      %p13 = scmp.ge.s32.totalorder %s12, 6
      %s22 = sphi 0, %s24
      %s25 = sphi 0, %s22
      %s26 = sphi 0, %s25
      %s42 = sphi 0, %s26
      %s46 = sphi 0, %s46
      %s48 = sphi 0, %s46
      %s49 = sphi 0, %s48
      %s63 = sphi 0, %s49
      %s67 = sphi 0, %s67
      %s69 = sphi 0, %s67
      %s70 = sphi 0, %s69
      %s84 = sphi 0, %s70
      %s90 = sphi 0, %s92
      %s93 = sphi 0, %s90
      %s94 = sphi 0, %s93
      %s110 = sphi 0, %s94
    $region4: #{tpu_custom_call.1} parent=1 // loop_header_branch
      %15 = sbr.rel (%p13) target = $region8
    $region5: #{tpu_custom_call.1} parent=1 // loop_body
      %s17 = ssub.s32 %s12, 1
      %s18 = ssub.s32 %s12, 2
      %s19 = sadd.s32 %s12, 1
      %s20 = ssub.s32 %s12, %s19
      %p21 = scmp.eq.s32.totalorder %s20, 0
      %s23 = sadd.s32 %s22, 1
      %s24 = scalar_select %p21, %s22, %s23
      %p27 = pneg %p21
      %p28 = scmp.eq.s32.totalorder %s12, 3
      %p29 = por %p27, %p28
      %p30 = scmp.ne.s32.totalorder %s22, %s25
      %p31 = scmp.eq.s32.totalorder %s12, 0
      %p32 = por %p30, %p31
      %p33 = scmp.ne.s32.totalorder %s22, %s25
      %p34 = scmp.eq.s32.totalorder %s17, 3
      %p35 = por %p33, %p34
      %p36 = scmp.ne.s32.totalorder %s25, %s26
      %p37 = scmp.eq.s32.totalorder %s17, 0
      %p38 = por %p36, %p37
      %p39 = scmp.ne.s32.totalorder %s25, %s26
      %p40 = scmp.eq.s32.totalorder %s18, 3
      %p41 = por %p39, %p40
      %p43 = scmp.ne.s32.totalorder %s26, %s42
      %p44 = scmp.eq.s32.totalorder %s18, 0
      %p45 = por %p43, %p44
      %s47 = sadd.s32 %s46, 1
      %p50 = scmp.eq.s32.totalorder %s12, 3
      %p51 = scmp.ne.s32.totalorder %s46, %s48
      %p52 = scmp.eq.s32.totalorder %s12, 0
      %p53 = por %p51, %p52
      %p54 = scmp.ne.s32.totalorder %s46, %s48
      %p55 = scmp.eq.s32.totalorder %s17, 3
      %p56 = por %p54, %p55
      %p57 = scmp.ne.s32.totalorder %s48, %s49
      %p58 = scmp.eq.s32.totalorder %s17, 0
      %p59 = por %p57, %p58
      %p60 = scmp.ne.s32.totalorder %s48, %s49
      %p61 = scmp.eq.s32.totalorder %s18, 3
      %p62 = por %p60, %p61
      %p64 = scmp.ne.s32.totalorder %s49, %s63
      %p65 = scmp.eq.s32.totalorder %s18, 0
      %p66 = por %p64, %p65
      %s68 = sadd.s32 %s67, 1
      %p71 = scmp.eq.s32.totalorder %s12, 3
      %p72 = scmp.ne.s32.totalorder %s67, %s69
      %p73 = scmp.eq.s32.totalorder %s12, 0
      %p74 = por %p72, %p73
      %p75 = scmp.ne.s32.totalorder %s67, %s69
      %p76 = scmp.eq.s32.totalorder %s17, 3
      %p77 = por %p75, %p76
      %p78 = scmp.ne.s32.totalorder %s69, %s70
      %p79 = scmp.eq.s32.totalorder %s17, 0
      %p80 = por %p78, %p79
      %p81 = scmp.ne.s32.totalorder %s69, %s70
      %p82 = scmp.eq.s32.totalorder %s18, 3
      %p83 = por %p81, %p82
      %p85 = scmp.ne.s32.totalorder %s70, %s84
      %p86 = scmp.eq.s32.totalorder %s18, 0
      %p87 = por %p85, %p86
      %s88 = ssub.s32 %s12, %s19
      %p89 = scmp.eq.s32.totalorder %s88, 0
      %s91 = sadd.s32 %s90, 1
      %s92 = scalar_select %p89, %s90, %s91
      %p95 = pneg %p89
      %p96 = scmp.eq.s32.totalorder %s12, 3
      %p97 = por %p95, %p96
      %p98 = scmp.ne.s32.totalorder %s90, %s93
      %p99 = scmp.eq.s32.totalorder %s12, 0
      %p100 = por %p98, %p99
      %p101 = scmp.ne.s32.totalorder %s90, %s93
      %p102 = scmp.eq.s32.totalorder %s17, 3
      %p103 = por %p101, %p102
      %p104 = scmp.ne.s32.totalorder %s93, %s94
      %p105 = scmp.eq.s32.totalorder %s17, 0
      %p106 = por %p104, %p105
      %p107 = scmp.ne.s32.totalorder %s93, %s94
      %p108 = scmp.eq.s32.totalorder %s18, 3
      %p109 = por %p107, %p108
      %p111 = scmp.ne.s32.totalorder %s94, %s110
      %p112 = scmp.eq.s32.totalorder %s18, 0
      %p113 = por %p111, %p112
      %p114 = scmp.le.s32.totalorder 1, %s12
      %p115 = scmp.lt.s32.totalorder %s12, 5
      %p116 = pnand %p114, %p115
      %p117 = pneg %p116
      // Predicated region
      $region9: #{tpu_custom_call.1} parent=5 // pred_check
        _
      $region10: #{tpu_custom_call.1} parent=5 // pred_check_branch
        %119 = sbr.rel (%p116) target = $region12
      $region11: #{tpu_custom_call.1} parent=5 // pred_region
        %s120 = ssub.s32 %s12, 1
        // Predicated region
        $region13: #{tpu_custom_call.1} parent=11 // pred_check
          %p121 = pneg %p59
        $region14: #{tpu_custom_call.1} parent=11 // pred_check_branch
          %123 = sbr.rel (%p121) target = $region16
        $region15: #{tpu_custom_call.1} parent=11 // pred_region
          _
        $region16: #{tpu_custom_call.1} parent=11 // pred_fallthru
          _
        // Predicated region
        $region17: #{tpu_custom_call.1} parent=11 // pred_check
          %p124 = pneg %p80
        $region18: #{tpu_custom_call.1} parent=11 // pred_check_branch
          %126 = sbr.rel (%p124) target = $region20
        $region19: #{tpu_custom_call.1} parent=11 // pred_region
          _
        $region20: #{tpu_custom_call.1} parent=11 // pred_fallthru
          _
      $region12: #{tpu_custom_call.1} parent=5 // pred_fallthru
        _
      %p127 = scmp.lt.s32.totalorder %s12, 4
      // Predicated region
      $region21: #{tpu_custom_call.1} parent=5 // pred_check
        %p128 = pneg %p127
      $region22: #{tpu_custom_call.1} parent=5 // pred_check_branch
        %130 = sbr.rel (%p128) target = $region24
      $region23: #{tpu_custom_call.1} parent=5 // pred_region
        // Predicated region
        $region25: #{tpu_custom_call.1} parent=23 // pred_check
          %p131 = pneg %p32
        $region26: #{tpu_custom_call.1} parent=23 // pred_check_branch
          %133 = sbr.rel (%p131) target = $region28
        $region27: #{tpu_custom_call.1} parent=23 // pred_region
          %p134 = scmp.lt.s32.totalorder %s12, 3
          %s135 = scalar_select %p134, %s12, 3
          %s136 = smul.addr %s135, 8
          %s137 = scalar_lea.vmem %s0, %s136
        $region28: #{tpu_custom_call.1} parent=23 // pred_fallthru
          _
      $region24: #{tpu_custom_call.1} parent=5 // pred_fallthru
        _
      %p138 = scmp.le.s32.totalorder 1, %s12
      %p139 = scmp.lt.s32.totalorder %s12, 5
      %p140 = pnand %p138, %p139
      %p141 = pneg %p140
      // Predicated region
      $region29: #{tpu_custom_call.1} parent=5 // pred_check
        _
      $region30: #{tpu_custom_call.1} parent=5 // pred_check_branch
        %143 = sbr.rel (%p140) target = $region32
      $region31: #{tpu_custom_call.1} parent=5 // pred_region
        %s144 = ssub.s32 %s12, 1
        %p145 = scmp.lt.s32.totalorder %s17, 3
        %s146 = scalar_select %p145, %s17, 3
        %s147 = smul.addr %s146, 8
        %s148 = scalar_lea.vmem %s0, %s147
        %p149 = pneg %p38
        %p150 = pneg %p35
        %p151 = pneg %p59
        %p152 = pneg %p56
        %p153 = pneg %p80
        %p154 = pneg %p77
        %p155 = pneg %p106
        %p156 = pneg %p103
        %s157 = sand.u32 %s93, 1
        %s158 = scalar_lea.sflag [#allocation3], %s157
        %s159 = sand.u32 %s93, 1
        %s160 = smul.addr %s159, 8
        %s161 = scalar_lea.vmem [#allocation2], %s160
        %p162 = scmp.lt.s32.totalorder %s17, 3
        %s163 = scalar_select %p162, %s17, 3
        %s164 = smul.addr %s163, 8
        %s165 = scalar_lea.vmem %s0, %s164
        %v166 = vld [vmem:[%s165] sm:$0xff]
        %v167 = vld [vmem:[%s1] sm:$0xff]
        %v168 = vld [vmem:[%s1 + $0x8] sm:$0xff]
        %v169 = vld [vmem:[%s2] sm:$0x1]
        %v171 = vlaneseq
        %v172 = vshrl.u32 %v171, 7
        %v173 = vsub.s32 0, %v172
        %v174 = vrot.slane %v169, %v173
        %vm176 = vcmask 130048
        %v178 = vsel %vm176, %v166, 0
        %180 = vmatprep.subr.mxu0 0.0
        %181 = vmatpush1.msra.mxu0 %v167
        %182 = vmatprep.subr.mxu0 0.0
        %183 = vmatpush1.msra.mxu0 %v168
        %184 = vmatprep.subr.mxu0 0.0
        %185 = vmatpush1.msra.mxu0 0.0
        %186 = vmatprep.subr.mxu0 0.0
        %187 = vmatpush1.msra.mxu0 0.0
        %188 = vmatprep.subr.mxu0 0.0
        %189 = vmatpush1.msra.mxu0 0.0
        %190 = vmatprep.subr.mxu0 0.0
        %191 = vmatpush1.msra.mxu0 0.0
        %192 = vmatprep.subr.mxu0 0.0
        %193 = vmatpush1.msra.mxu0 0.0
        %194 = vmatprep.subr.mxu0 0.0
        %195 = vmatpush1.msra.mxu0 0.0
        %196 = vmatprep.subr.mxu0 0.0
        %197 = vmatpush1.msra.mxu0 0.0
        %198 = vmatprep.subr.mxu0 0.0
        %199 = vmatpush1.msra.mxu0 0.0
        %200 = vmatprep.subr.mxu0 0.0
        %201 = vmatpush1.msra.mxu0 0.0
        %202 = vmatprep.subr.mxu0 0.0
        %203 = vmatpush1.msra.mxu0 0.0
        %204 = vmatprep.subr.mxu0 0.0
        %205 = vmatpush1.msra.mxu0 0.0
        %206 = vmatprep.subr.mxu0 0.0
        %207 = vmatpush1.msra.mxu0 0.0
        %208 = vmatprep.subr.mxu0 0.0
        %209 = vmatpush1.msra.mxu0 0.0
        %210 = vmatprep.subr.mxu0 0.0
        %211 = vmatpush1.msra.mxu0 0.0
        %212 = vmatprep.subr.mxu0 0.0
        %213 = vmatpush1.msra.mxu0 0.0
        %214 = vmatprep.subr.mxu0 0.0
        %215 = vmatpush1.msra.mxu0 0.0
        %216 = vmatprep.subr.mxu0 0.0
        %217 = vmatpush1.msra.mxu0 0.0
        %218 = vmatprep.subr.mxu0 0.0
        %219 = vmatpush1.msra.mxu0 0.0
        %220 = vmatprep.subr.mxu0 0.0
        %221 = vmatpush1.msra.mxu0 0.0
        %222 = vmatprep.subr.mxu0 0.0
        %223 = vmatpush1.msra.mxu0 0.0
        %224 = vmatprep.subr.mxu0 0.0
        %225 = vmatpush1.msra.mxu0 0.0
        %226 = vmatprep.subr.mxu0 0.0
        %227 = vmatpush1.msra.mxu0 0.0
        %228 = vmatprep.subr.mxu0 0.0
        %229 = vmatpush1.msra.mxu0 0.0
        %230 = vmatprep.subr.mxu0 0.0
        %231 = vmatpush1.msra.mxu0 0.0
        %232 = vmatprep.subr.mxu0 0.0
        %233 = vmatpush1.msra.mxu0 0.0
        %234 = vmatprep.subr.mxu0 0.0
        %235 = vmatpush1.msra.mxu0 0.0
        %236 = vmatprep.subr.mxu0 0.0
        %237 = vmatpush1.msra.mxu0 0.0
        %238 = vmatprep.subr.mxu0 0.0
        %239 = vmatpush1.msra.mxu0 0.0
        %240 = vmatprep.subr.mxu0 0.0
        %241 = vmatpush1.msra.mxu0 0.0
        %242 = vmatprep.subr.mxu0 0.0
        %243 = vmatpush1.msra.mxu0 0.0
        %244 = vmatprep.mubr.f32.mxu0 0.0
        %245 = vmatmul.mubr.f32.gmra.mrb[0].mxu0 %v178
        %v246 = vpop.f32.mrb[0].mxu0
        %v247 = vadd.f32 %v174, %v246
        %v248 = vpop.f32.mrb[0].mxu0
        %249 = vdwg.mxu0
        %v250 = vand.u32 2147483647, %v247
        %vm251 = vcmp.le.f32.partialorder %v250, 0.7853982
        %vm252 = vcmp.lt.s32.totalorder %v247, 0
        %v253 = vand.u32 %v247, 2139095040
        %v254 = vshrl.u32 %v253, 23
        %v255 = vsub.s32 %v254, 127
        %v256 = vand.u32 2147483647, %v247
        %v257 = vand.u32 %v256, 8388607
        %v258 = vor.u32 %v257, 8388608
        %v259 = vsub.s32 0, %v258
        %v260 = vadd.s32 %v255, 1
        %vm261 = vcmp.gt.s32.totalorder %v260, 0
        %v262 = vsel %vm261, %v260, 0
        %v263 = vshrl.u32 %v262, 5
        %v264 = vand.u32 %v262, 31
        %v265 = vsub.s32 32, %v264
        %v266 = vshrl.u32 683565275, %v265
        %v267 = vshll.u32 683565275, %v264
        %v268 = vshrl.u32 2475754826, %v265
        %v269 = vor.u32 %v267, %v268
        %v270 = vshll.u32 2475754826, %v264
        %v271 = vshrl.u32 2131351028, %v265
        %v272 = vor.u32 %v270, %v271
        %v273 = vshll.u32 2131351028, %v264
        %v274 = vshrl.u32 2102212464, %v265
        %v275 = vor.u32 %v273, %v274
        %v276 = vshll.u32 2102212464, %v264
        %v277 = vshrl.u32 920167782, %v265
        %v278 = vor.u32 %v276, %v277
        %v279 = vshll.u32 920167782, %v264
        %v280 = vshrl.u32 1326507024, %v265
        %v281 = vor.u32 %v279, %v280
        %vm282 = vcmp.lt.s32.totalorder %v263, 1
        %vm283 = vcmp.lt.s32.totalorder %v263, 2
        %vm284 = vcmp.lt.s32.totalorder %v263, 3
        %vm285 = vcmp.lt.s32.totalorder %v263, 4
        %v286 = vsel %vm282, %v266, %v269
        %v287 = vsel %vm285, %v275, 2102212464
        %v288 = vsel %vm284, %v272, %v287
        %v289 = vsel %vm283, %v286, %v288
        %v290 = vsel %vm282, %v269, %v272
        %v291 = vsel %vm285, %v278, 920167782
        %v292 = vsel %vm284, %v275, %v291
        %v293 = vsel %vm283, %v290, %v292
        %v294 = vsel %vm282, %v272, %v275
        %v295 = vsel %vm285, %v281, 1326507024
        %v296 = vsel %vm284, %v278, %v295
        %v297 = vsel %vm283, %v294, %v296
        %v298 = vshll.u32 %v258, 8
        %v299 = vmul.u32.u64.compose %v298, %v297
        %v300 = vextract.low.u32 %v299
        %v301 = vextract.high.u32 %v299
        %v302 = vmul.u32.u64.compose %v298, %v293
        %v303 = vextract.low.u32 %v302
        %v304 = vextract.high.u32 %v302
        %v305 = vmul.u32 %v298, %v289
        %v306 = vadd.s32 %v301, %v303
        %vm307 = vc.u32 %v301, %v303
        %v308 = vadd.s32 %v304, 1
        %v309 = vsel %vm307, %v308, %v304
        %v310 = vadd.s32 %v305, %v309
        %v311 = vadd.s32 %v310, 536870912
        %v312 = vshrl.u32 %v311, 30
        %v313 = vshll.u32 %v312, 30
        %v314 = vsub.s32 %v310, %v313
        %vm315 = vcmp.lt.s32.totalorder %v314, 0
        %v316 = vsub.s32 0, %v314
        %v317 = vsel %vm315, %v316, %v314
        %v318 = vclz %v317
        %v319 = vsub.s32 %v318, 2
        %vm320 = vcmp.gt.s32.totalorder 0, %v319
        %v321 = vsel %vm320, 0, %v319
        %v322 = vsub.s32 32, %v321
        %v323 = vshll.u32 %v314, %v321
        %v324 = vshrl.u32 %v306, %v322
        %v325 = vor.u32 %v323, %v324
        %v326 = vsub.s32 4294967266, %v321
        %v327 = vadd.s32 %v326, 127
        %v328 = vshll.u32 %v327, 23
        %v329 = vor.u32 4788187, %v328
        %v330 = vand.u32 2147483647, %v329
        %v332 = vcvt.s32.f32 %v325
        %v333 = vmul.f32 %v332, %v330
        %v334 = vxor.u32 %v333, 2147483648
        %v335 = vsel %vm252, %v334, %v333
        %v336 = vsub.s32 4, %v312
        %v337 = vsel %vm252, %v336, %v312
        %v338 = vsel %vm251, %v247, %v335
        %v339 = vsel %vm251, 0, %v337
        %v340 = vcosq.f32.pop %v338
        %v341 = vsinq.f32.pop %v338
        %vm342 = vweird.f32 %v247
        %v343 = vadd.s32 %v339, 3
        %v344 = vand.u32 %v343, 3
        %vm345 = vcmp.lt.s32.totalorder %v344, 2
        %vm346 = vcmp.eq.s32.totalorder %v344, 0
        %v347 = vxor.u32 %v341, 2147483648
        %v348 = vsel %vm346, %v340, %v347
        %vm349 = vcmp.eq.s32.totalorder %v344, 2
        %v350 = vxor.u32 %v340, 2147483648
        %v351 = vsel %vm349, %v350, %v341
        %v352 = vsel %vm345, %v348, %v351
        %v353 = vsel %vm342, nan, %v352
        %354 = vst [vmem:[%s161] sm:$0xff] %v353
        %s355 = sand.u32 %s93, 1
        %s356 = scalar_lea.sflag [#allocation3], %s355
        %s357 = sand.u32 %s93, 1
        %s358 = smul.addr %s357, 8
        %s359 = scalar_lea.vmem [#allocation2], %s358
        // Predicated region
        $region33: #{tpu_custom_call.1} parent=31 // pred_check
          %p360 = pneg %p103
        $region34: #{tpu_custom_call.1} parent=31 // pred_check_branch
          %362 = sbr.rel (%p360) target = $region36
        $region35: #{tpu_custom_call.1} parent=31 // pred_region
          %s364 = ssub.s32 128, 128
          %365 = vsyncadd %s356, %s364
          %s366 = smul.addr %s17, 128
          %s367 = scalar_lea.hbm %s3, %s366
          %s369 = sshll.u32 %s359, 4
          %s370 = int_to_ptr.vmem [resolvable:$true] %s369
          %372 = dma.vmem_to_hbm [thread:$0]  %s370, 128, %s367, %s356
        $region36: #{tpu_custom_call.1} parent=31 // pred_fallthru
          _
      $region32: #{tpu_custom_call.1} parent=5 // pred_fallthru
        _
      %p373 = scmp.le.s32.totalorder 2, %s12
      // Predicated region
      $region37: #{tpu_custom_call.1} parent=5 // pred_check
        %p374 = pneg %p373
      $region38: #{tpu_custom_call.1} parent=5 // pred_check_branch
        %376 = sbr.rel (%p374) target = $region40
      $region39: #{tpu_custom_call.1} parent=5 // pred_region
        %s377 = ssub.s32 %s12, 2
        // Predicated region
        $region41: #{tpu_custom_call.1} parent=39 // pred_check
          %p378 = pneg %p109
        $region42: #{tpu_custom_call.1} parent=39 // pred_check_branch
          %380 = sbr.rel (%p378) target = $region44
        $region43: #{tpu_custom_call.1} parent=39 // pred_region
          %s381 = sand.u32 %s94, 1
          %s382 = scalar_lea.sflag [#allocation3], %s381
          %s383 = sand.u32 %s94, 1
          %s384 = smul.addr %s383, 8
          %s385 = scalar_lea.vmem [#allocation2], %s384
          %386 = dma.done %s382, 128
        $region44: #{tpu_custom_call.1} parent=39 // pred_fallthru
          _
      $region40: #{tpu_custom_call.1} parent=5 // pred_fallthru
        _
    $region6: #{tpu_custom_call.1} parent=1 // loop_footer
      %s16 = sadd.s32 1, %s12
    $region7: #{tpu_custom_call.1} parent=1 // loop_footer_branch
      %11 = sbr.rel target = $region3
    $region8: #{tpu_custom_call.1} parent=1 // loop_exit
      _
    %387 = vsyncpa [#allocation3], 1
    %s388 = scalar_lea.sflag [#allocation3], 1
    %389 = vsyncpa %s388, 1

</llo_original>
